<compile_context>
chip_gen: v7x
topology: tpu7x:2x2x1
jax: 0.10.0
libtpu: 0.0.40
codegen_flags: <defaults>
</compile_context>

<pallas_src>
import jax
import jax.numpy as jnp
from jax import lax
from jax.experimental import pallas as pl
from jax.experimental.pallas import tpu as pltpu


_LANES = 256  # lane-dense last dim (multiple of 128)


def _chip_config():
    """Per-generation (TM_MAX, NUM_PARTS, VMEM_LIMIT_BYTES); conservative fallback."""
    try:
        kind = jax.devices()[0].device_kind.lower()
    except Exception:  # pragma: no cover - defensive
        kind = ""
    if "v7" in kind or "7x" in kind:
        # v7x: ~3.2 TB/s HBM, 64 MiB physical VMEM, 2 TensorCores.
        return 4096, 2, 40 * 1024 * 1024
    if "v6" in kind:
        # v6e: ~1.4 TB/s HBM, 128 MiB physical VMEM, 1 TensorCore.
        return 8192, 1, 64 * 1024 * 1024
    # v5e and older / unknown: conservative defaults.
    return 2048, 1, 32 * 1024 * 1024


def _make_loss_kernel(num_parts, bpp, last_block, last_valid_rows, tm_rows, n_lanes,
                      fold_k, acc_rows, has_dup_blocks):
    full_last = (last_valid_rows == tm_rows)

    def fold(x):
        # Fold the (tm_rows, N) tile into the (acc_rows, N) accumulator with VPU adds
        # only (major-axis reshape + reduce: no lane/sublane movement).
        if fold_k > 1:
            return jnp.sum(x.reshape(fold_k, acc_rows, n_lanes), axis=0)
        return x

    def loss_kernel(p_ref, t_ref, e_ref, out_ref, acc_ref):
        if num_parts > 1:
            part = pl.program_id(0)
            step = pl.program_id(1)
            block = part * bpp + step
            step_axis = 1
        else:
            step = pl.program_id(0)
            block = step
            step_axis = 0

        # Zero the per-core vector accumulator at the start of each part's reduction.
        @pl.when(step == 0)
        def _():
            acc_ref[...] = jnp.zeros_like(acc_ref)

        p = p_ref[...].astype(jnp.float32)
        t = t_ref[...].astype(jnp.float32)
        e = e_ref[...].astype(jnp.float32)

        d = p - t
        # EUP approximate reciprocal + one f32 Newton refinement (3 VPU ops) keeps the
        # reciprocal off any VPU divide chain while restoring ~f32 accuracy.
        # NOTE: target_err == 0 yields NaN here (the reference divide yields inf).
        r = pl.reciprocal(e, approx=True)
        r = r * (2.0 - e * r)
        w = (d * d) * r

        if full_last and not has_dup_blocks:
            # Every logical block is fully valid: no masking anywhere (hot path).
            acc_ref[...] += fold(w)
        else:
            # Unmasked accumulate for all fully-valid blocks (the hot path).
            full_upper = last_block + 1 if full_last else last_block

            @pl.when(block < full_upper)
            def _():
                acc_ref[...] += fold(w)

            if not full_last:
                # Only the last logical block has invalid rows; mask with a SELECT
                # (not a multiply) so garbage/NaN rows are forced to exactly 0.
                @pl.when(block == last_block)
                def _():
                    rows = lax.broadcasted_iota(jnp.int32, (tm_rows, n_lanes), 0)
                    acc_ref[...] += fold(jnp.where(rows < last_valid_rows, w, 0.0))
            # Clamped duplicate blocks (block > last_block) contribute nothing.

        # Write the lane-dense accumulator slab once at the end of this part.
        @pl.when(step == pl.num_programs(step_axis) - 1)
        def _():
            out_ref[...] = acc_ref[...].reshape(1, acc_rows, n_lanes)

    return loss_kernel


def custom_loss(preds: jax.Array, targets: jax.Array, target_err: jax.Array) -> jax.Array:
    """mean(((preds - targets)^2) / target_err), computed in a Pallas TPU kernel."""
    assert preds.shape == targets.shape == target_err.shape
    total = preds.size
    N = _LANES

    p_flat = preds.reshape(-1)
    t_flat = targets.reshape(-1)
    e_flat = target_err.reshape(-1)

    rem = total % N
    main = total - rem

    # Ragged tail (<256 elements): tiny plain-jnp expression in the wrapper — no
    # full-array jnp.pad copies, no extra HBM traffic on the big aligned prefix.
    if rem:
        pt = p_flat[main:].astype(jnp.float32)
        tt = t_flat[main:].astype(jnp.float32)
        et = e_flat[main:].astype(jnp.float32)
        dt = pt - tt
        tail_sum = jnp.sum(dt * dt / et)
    else:
        tail_sum = jnp.float32(0.0)

    if main == 0:
        return tail_sum / total

    M = main // N
    p2 = (p_flat[:main] if rem else p_flat).reshape(M, N)  # native dtype; cast in-kernel
    t2 = (t_flat[:main] if rem else t_flat).reshape(M, N)
    e2 = (e_flat[:main] if rem else e_flat).reshape(M, N)

    tm_max, num_parts, vmem_limit = _chip_config()

    # Sublane tile of the narrowest input dtype: 8 for 4-byte, 16 for bf16, 32 for 1-byte.
    min_itemsize = min(p2.dtype.itemsize, t2.dtype.itemsize, e2.dtype.itemsize)
    sub = max(32 // max(min_itemsize, 1), 8)

    if M < sub:
        TM = M
    else:
        TM = min(tm_max, (M // sub) * sub)

    blocks_total = (M + TM - 1) // TM
    num_parts = max(1, min(num_parts, blocks_total))
    bpp = (blocks_total + num_parts - 1) // num_parts      # blocks per parallel part
    last_block = blocks_total - 1
    last_valid_rows = M - last_block * TM                   # static: rows valid in last block
    has_dup = num_parts * bpp > blocks_total

    if TM % 8 == 0:
        acc_rows, fold_k = 8, TM // 8
    else:
        acc_rows, fold_k = TM, 1

    if num_parts > 1:
        grid = (num_parts, bpp)
        in_spec = pl.BlockSpec(
            (TM, N), lambda c, i: (jnp.minimum(c * bpp + i, last_block), 0))
        out_spec = pl.BlockSpec((1, acc_rows, N), lambda c, i: (c, 0, 0))
        # TODO(synk): verify in the Mosaic/bundle dump that this size-2 axis really
        # shards across v7x's two TensorCores; if it serializes, switch this axis to
        # pltpu.CORE_PARALLEL.
        dim_sem = (pltpu.PARALLEL, pltpu.ARBITRARY)
    else:
        grid = (blocks_total,)
        in_spec = pl.BlockSpec((TM, N), lambda i: (i, 0))
        out_spec = pl.BlockSpec((1, acc_rows, N), lambda i: (0, 0, 0))
        dim_sem = (pltpu.ARBITRARY,)

    kernel = _make_loss_kernel(num_parts, bpp, last_block, last_valid_rows, TM, N,
                               fold_k, acc_rows, has_dup)

    partials = pl.pallas_call(
        kernel,
        out_shape=jax.ShapeDtypeStruct((num_parts, acc_rows, N), jnp.float32),
        grid_spec=pltpu.PrefetchScalarGridSpec(
            num_scalar_prefetch=0,
            grid=grid,
            in_specs=[in_spec, in_spec, in_spec],
            out_specs=out_spec,
            scratch_shapes=[pltpu.VMEM((acc_rows, N), jnp.float32)],
        ),
        compiler_params=pltpu.CompilerParams(
            dimension_semantics=dim_sem,
            vmem_limit_bytes=vmem_limit,
        ),
    )(p2, t2, e2)

    # Tiny cross-lane / cross-part combine + mean in the wrapper.
    return (jnp.sum(partials, dtype=jnp.float32) + tail_sum) / total


if __name__ == "__main__":
    key = jax.random.PRNGKey(0)

    # Test 1: small NCHW-like prediction tensor (2048 elements, exactly 8 lane-rows).
    k1, k2, k3 = jax.random.split(key, 3)
    shape = (2, 4, 16, 16)
    preds = jax.random.normal(k1, shape, dtype=jnp.float32)
    targets = jax.random.normal(k2, shape, dtype=jnp.float32)
    target_err = jax.random.uniform(k3, shape, dtype=jnp.float32, minval=0.5, maxval=2.0)

    loss = jax.block_until_ready(custom_loss(preds, targets, target_err))
    ref = jnp.mean((preds - targets) ** 2 / target_err)
    assert jnp.allclose(loss, ref, rtol=1e-5, atol=1e-6), (loss, ref)

    # Test 2: ragged size (18000 elements) exercising the wrapper-jnp tail path and the
    # masked last block (no jnp.pad copies).
    k4, k5, k6 = jax.random.split(jax.random.PRNGKey(1), 3)
    shape2 = (4, 3, 50, 30)
    preds2 = jax.random.normal(k4, shape2, dtype=jnp.float32)
    targets2 = jax.random.normal(k5, shape2, dtype=jnp.float32)
    target_err2 = jax.random.uniform(k6, shape2, dtype=jnp.float32, minval=0.5, maxval=2.0)

    loss2 = jax.block_until_ready(custom_loss(preds2, targets2, target_err2))
    ref2 = jnp.mean((preds2 - targets2) ** 2 / target_err2)
    assert jnp.allclose(loss2, ref2, rtol=1e-5, atol=1e-6), (loss2, ref2)

    print("KERNEL_OK")
</pallas_src>

<mosaic_0001>
module attributes {stable_mosaic.version = 11 : i64} {
  func.func @loss_kernel(%arg0: i32, %arg1: memref<8x256xf32, #tpu.memory_space<vmem>>, %arg2: memref<8x256xf32, #tpu.memory_space<vmem>>, %arg3: memref<8x256xf32, #tpu.memory_space<vmem>>, %arg4: memref<1x8x256xf32, #tpu.memory_space<vmem>>, %arg5: memref<8x256xf32, #tpu.memory_space<vmem>>) attributes {dimension_semantics = [#tpu.dimension_semantics<arbitrary>], iteration_bounds = array<i64: 1>, scalar_prefetch = 0 : i64, scratch_operands = 1 : i64, tpu.core_type = #tpu.core_type<tc>, window_params = [{transform_indices = @transform_0, window_bounds = array<i64: 8, 256>}, {transform_indices = @transform_1, window_bounds = array<i64: 8, 256>}, {transform_indices = @transform_2, window_bounds = array<i64: 8, 256>}, {pipeline_mode = #tpu.pipeline_mode<synchronous>, transform_indices = @transform_3, window_bounds = array<i64: 1, 8, 256>}]} {
    %c0_i32 = arith.constant 0 : i32
    %0 = arith.cmpi eq, %arg0, %c0_i32 : i32
    %1 = arith.extui %0 : i1 to i32
    %c0_i32_0 = arith.constant 0 : i32
    %2 = arith.cmpi ne, %1, %c0_i32_0 : i32
    scf.if %2 {
      %cst_12 = arith.constant 0.000000e+00 : f32
      %20 = vector.broadcast %cst_12 : f32 to vector<8x256xf32>
      %c0_13 = arith.constant 0 : index
      %c0_14 = arith.constant 0 : index
      %21 = vector.load %arg5[%c0_13, %c0_14] : memref<8x256xf32, #tpu.memory_space<vmem>>, vector<8x256xf32>
      tpu.vector_store %arg5[%c0_13, %c0_14], %20 {strides = array<i32>} : memref<8x256xf32, #tpu.memory_space<vmem>>, vector<8x256xf32>,
    } else {
    }
    %c0 = arith.constant 0 : index
    %c0_1 = arith.constant 0 : index
    %3 = vector.load %arg1[%c0, %c0_1] : memref<8x256xf32, #tpu.memory_space<vmem>>, vector<8x256xf32>
    %c0_2 = arith.constant 0 : index
    %c0_3 = arith.constant 0 : index
    %4 = vector.load %arg2[%c0_2, %c0_3] : memref<8x256xf32, #tpu.memory_space<vmem>>, vector<8x256xf32>
    %c0_4 = arith.constant 0 : index
    %c0_5 = arith.constant 0 : index
    %5 = vector.load %arg3[%c0_4, %c0_5] : memref<8x256xf32, #tpu.memory_space<vmem>>, vector<8x256xf32>
    %6 = arith.subf %3, %4 : vector<8x256xf32>
    %7 = tpu.reciprocal %5 {approx = true} : vector<8x256xf32> -> vector<8x256xf32>
    %8 = arith.mulf %5, %7 : vector<8x256xf32>
    %cst = arith.constant 2.000000e+00 : f32
    %9 = vector.broadcast %cst : f32 to vector<8x256xf32>
    %10 = arith.subf %9, %8 : vector<8x256xf32>
    %11 = arith.mulf %7, %10 : vector<8x256xf32>
    %12 = arith.mulf %6, %6 : vector<8x256xf32>
    %13 = arith.mulf %12, %11 : vector<8x256xf32>
    %c0_6 = arith.constant 0 : index
    %c0_7 = arith.constant 0 : index
    %14 = vector.load %arg5[%c0_6, %c0_7] : memref<8x256xf32, #tpu.memory_space<vmem>>, vector<8x256xf32>
    %15 = arith.addf %14, %13 : vector<8x256xf32>
    %c0_8 = arith.constant 0 : index
    %c0_9 = arith.constant 0 : index
    %16 = vector.load %arg5[%c0_8, %c0_9] : memref<8x256xf32, #tpu.memory_space<vmem>>, vector<8x256xf32>
    tpu.vector_store %arg5[%c0_8, %c0_9], %15 {strides = array<i32>} : memref<8x256xf32, #tpu.memory_space<vmem>>, vector<8x256xf32>,
    %c0_i32_10 = arith.constant 0 : i32
    %17 = arith.cmpi eq, %arg0, %c0_i32_10 : i32
    %18 = arith.extui %17 : i1 to i32
    %c0_i32_11 = arith.constant 0 : i32
    %19 = arith.cmpi ne, %18, %c0_i32_11 : i32
    scf.if %19 {
      %c0_12 = arith.constant 0 : index
      %c0_13 = arith.constant 0 : index
      %20 = vector.load %arg5[%c0_12, %c0_13] : memref<8x256xf32, #tpu.memory_space<vmem>>, vector<8x256xf32>
      %21 = vector.shape_cast %20 : vector<8x256xf32> to vector<1x8x256xf32>
      %c0_14 = arith.constant 0 : index
      %c0_15 = arith.constant 0 : index
      %c0_16 = arith.constant 0 : index
      %22 = vector.load %arg4[%c0_14, %c0_15, %c0_16] : memref<1x8x256xf32, #tpu.memory_space<vmem>>, vector<1x8x256xf32>
      tpu.vector_store %arg4[%c0_14, %c0_15, %c0_16], %21 {strides = array<i32>} : memref<1x8x256xf32, #tpu.memory_space<vmem>>, vector<1x8x256xf32>,
    } else {
    }
    return
  }
  func.func @transform_0(%arg0: i32) -> (i32, i32) {
    %c0_i32 = arith.constant 0 : i32
    %c0_i32_0 = arith.constant 0 : i32
    return %arg0, %c0_i32 : i32, i32
  }
  func.func @transform_1(%arg0: i32) -> (i32, i32) {
    %c0_i32 = arith.constant 0 : i32
    %c0_i32_0 = arith.constant 0 : i32
    return %arg0, %c0_i32 : i32, i32
  }
  func.func @transform_2(%arg0: i32) -> (i32, i32) {
    %c0_i32 = arith.constant 0 : i32
    %c0_i32_0 = arith.constant 0 : i32
    return %arg0, %c0_i32 : i32, i32
  }
  func.func @transform_3(%arg0: i32) -> (i32, i32, i32) {
    %c0_i32 = arith.constant 0 : i32
    %c0_i32_0 = arith.constant 0 : i32
    %c0_i32_1 = arith.constant 0 : i32
    %c0_i32_2 = arith.constant 0 : i32
    return %c0_i32, %c0_i32_0, %c0_i32_1 : i32, i32, i32
  }
}

</mosaic_0001>

<llo_original>
// kernel: tpu_custom_call.1
$region0: #{tpu_custom_call.1}
  #allocation0 [shape = 'u32[]', space=smem, size = 0x4, offset = 0x4, fixed_abs, tag = 'smem constant byte address 0x4 - core index']
  #allocation1 [shape = 'u32[144,128]{1,0:T(1,128)}', space=vmem, size = 0x12000, scoped, tag = 'internal scratch']
  #allocation2 [shape = 'f32[8,256]{1,0:T(8,128)}', space=vmem, size = 0x2000, scoped, tag = 'scratch operand']
  %s0 = inlined_call_operand.hbm [shape: f32[8,256], index: 0, kind: input, shape index: {}]
  %s1 = inlined_call_operand.hbm [shape: f32[8,256], index: 1, kind: input, shape index: {}]
  %s2 = inlined_call_operand.hbm [shape: f32[8,256], index: 2, kind: input, shape index: {}]
  %s3 = inlined_call_operand.hbm [shape: f32[1,8,256], index: 3, kind: output, shape index: {}]
  %s4 = sld [smem:[#allocation0]]
  $region42: #{tpu_custom_call.1} parent=0
    _
  %s6 = ssub.s32 1, %s4
  %s7 = scalar_select 0, %s6, %s4
  $region1: #{tpu_custom_call.1} parent=0
    #allocation3 [shape = 'u8[8192]{0}', space=vmem, size = 0x2000, scoped, tag = 'input window, operand 0, single buffered']
    #allocation4 [shape = 's32[1]{0}', space=sflag, size = 0x4, scoped, tag = 'scoped memory for tpu_custom_call.1']
    #allocation5 [shape = 's32[1]{0}', space=sflag, size = 0x4, scoped, tag = 'scoped memory for tpu_custom_call.1']
    #allocation6 [shape = 'u8[8192]{0}', space=vmem, size = 0x2000, scoped, tag = 'input window, operand 1, single buffered']
    #allocation7 [shape = 's32[1]{0}', space=sflag, size = 0x4, scoped, tag = 'scoped memory for tpu_custom_call.1']
    #allocation8 [shape = 'u8[8192]{0}', space=vmem, size = 0x2000, scoped, tag = 'input window, operand 2, single buffered']
    #allocation9 [shape = 'u8[8192]{0}', space=vmem, size = 0x2000, scoped, tag = 'output window, operand 0, single buffered']
    %8 = vsyncpa [#allocation4], 0
    %9 = vsyncpa [#allocation7], 0
    %10 = vsyncpa [#allocation5], 0
    // Predicated region
    $region2: #{tpu_custom_call.1} parent=1 // pred_check
      _
    $region3: #{tpu_custom_call.1} parent=1 // pred_check_branch
      %12 = sbr.rel (0) target = $region5
    $region4: #{tpu_custom_call.1} parent=1 // pred_region
      %s14 = ssub.s32 256, 256
      %15 = vsyncadd [#allocation4], %s14
      %s17 = sshll.u32 [#allocation3], 4
      %s18 = int_to_ptr.vmem [resolvable:$true] %s17
      %20 = dma.hbm_to_vmem [thread:$0]  %s0, 256, %s18, [#allocation4]
    $region5: #{tpu_custom_call.1} parent=1 // pred_fallthru
      _
    // Predicated region
    $region6: #{tpu_custom_call.1} parent=1 // pred_check
      _
    $region7: #{tpu_custom_call.1} parent=1 // pred_check_branch
      %22 = sbr.rel (0) target = $region9
    $region8: #{tpu_custom_call.1} parent=1 // pred_region
      %s24 = ssub.s32 256, 256
      %25 = vsyncadd [#allocation7], %s24
      %s27 = sshll.u32 [#allocation6], 4
      %s28 = int_to_ptr.vmem [resolvable:$true] %s27
      %30 = dma.hbm_to_vmem [thread:$0]  %s1, 256, %s28, [#allocation7]
    $region9: #{tpu_custom_call.1} parent=1 // pred_fallthru
      _
    // Predicated region
    $region10: #{tpu_custom_call.1} parent=1 // pred_check
      _
    $region11: #{tpu_custom_call.1} parent=1 // pred_check_branch
      %32 = sbr.rel (0) target = $region13
    $region12: #{tpu_custom_call.1} parent=1 // pred_region
      %s34 = ssub.s32 256, 256
      %35 = vsyncadd [#allocation7], %s34
      %s37 = sshll.u32 [#allocation8], 4
      %s38 = int_to_ptr.vmem [resolvable:$true] %s37
      %40 = dma.hbm_to_vmem [thread:$0]  %s2, 256, %s38, [#allocation7]
    $region13: #{tpu_custom_call.1} parent=1 // pred_fallthru
      _
    // Predicated region
    $region14: #{tpu_custom_call.1} parent=1 // pred_check
      _
    $region15: #{tpu_custom_call.1} parent=1 // pred_check_branch
      %42 = sbr.rel (0) target = $region17
    $region16: #{tpu_custom_call.1} parent=1 // pred_region
      %43 = dma.done [#allocation4], 256
    $region17: #{tpu_custom_call.1} parent=1 // pred_fallthru
      _
    // Predicated region
    $region18: #{tpu_custom_call.1} parent=1 // pred_check
      _
    $region19: #{tpu_custom_call.1} parent=1 // pred_check_branch
      %45 = sbr.rel (0) target = $region21
    $region20: #{tpu_custom_call.1} parent=1 // pred_region
      %46 = dma.done [#allocation7], 256
    $region21: #{tpu_custom_call.1} parent=1 // pred_fallthru
      _
    // Predicated region
    $region22: #{tpu_custom_call.1} parent=1 // pred_check
      _
    $region23: #{tpu_custom_call.1} parent=1 // pred_check_branch
      %48 = sbr.rel (0) target = $region25
    $region24: #{tpu_custom_call.1} parent=1 // pred_region
      %49 = dma.done [#allocation7], 256
    $region25: #{tpu_custom_call.1} parent=1 // pred_fallthru
      _
    %p50 = scmp.eq.s32.totalorder 0, 0
    // Predicated region
    $region26: #{tpu_custom_call.1} parent=1 // pred_check
      %p51 = pneg %p50
    $region27: #{tpu_custom_call.1} parent=1 // pred_check_branch
      %53 = sbr.rel (%p51) target = $region29
    $region28: #{tpu_custom_call.1} parent=1 // pred_region
      %54 = vst [vmem:[#allocation2] sm:$0xff] 0.0
      %55 = vst [vmem:[#allocation2 + $0x8] sm:$0xff] 0.0
    $region29: #{tpu_custom_call.1} parent=1 // pred_fallthru
      _
    %v56 = vld [vmem:[#allocation3] sm:$0xff]
    %v57 = vld [vmem:[#allocation3 + $0x8] sm:$0xff]
    %v58 = vld [vmem:[#allocation6] sm:$0xff]
    %v59 = vld [vmem:[#allocation6 + $0x8] sm:$0xff]
    %v60 = vld [vmem:[#allocation8] sm:$0xff]
    %v61 = vld [vmem:[#allocation8 + $0x8] sm:$0xff]
    %v62 = vsub.f32 %v56, %v58
    %v63 = vsub.f32 %v57, %v59
    %v64 = vrcp.pop %v60
    %v65 = vrcp.pop %v61
    %v66 = vmul.f32 %v60, %v64
    %v67 = vmul.f32 %v61, %v65
    %v68 = vsub.f32 2.0, %v66
    %v69 = vsub.f32 2.0, %v67
    %v70 = vmul.f32 %v64, %v68
    %v71 = vmul.f32 %v65, %v69
    %v72 = vmul.f32 %v62, %v62
    %v73 = vmul.f32 %v63, %v63
    %v74 = vmul.f32 %v72, %v70
    %v75 = vmul.f32 %v73, %v71
    %v76 = vld [vmem:[#allocation2] sm:$0xff]
    %v77 = vld [vmem:[#allocation2 + $0x8] sm:$0xff]
    %v78 = vadd.f32 %v76, %v74
    %v79 = vadd.f32 %v77, %v75
    %80 = vst [vmem:[#allocation2] sm:$0xff] %v78
    %81 = vst [vmem:[#allocation2 + $0x8] sm:$0xff] %v79
    // Predicated region
    $region30: #{tpu_custom_call.1} parent=1 // pred_check
      %p82 = pneg %p50
    $region31: #{tpu_custom_call.1} parent=1 // pred_check_branch
      %84 = sbr.rel (%p82) target = $region33
    $region32: #{tpu_custom_call.1} parent=1 // pred_region
      %v85 = vld [vmem:[#allocation2] sm:$0xff]
      %v86 = vld [vmem:[#allocation2 + $0x8] sm:$0xff]
      %87 = vst [vmem:[#allocation9] sm:$0xff] %v85
      %88 = vst [vmem:[#allocation9 + $0x8] sm:$0xff] %v86
    $region33: #{tpu_custom_call.1} parent=1 // pred_fallthru
      _
    // Predicated region
    $region34: #{tpu_custom_call.1} parent=1 // pred_check
      _
    $region35: #{tpu_custom_call.1} parent=1 // pred_check_branch
      %90 = sbr.rel (0) target = $region37
    $region36: #{tpu_custom_call.1} parent=1 // pred_region
      %s92 = ssub.s32 256, 256
      %93 = vsyncadd [#allocation5], %s92
      %s95 = sshll.u32 [#allocation9], 4
      %s96 = int_to_ptr.vmem [resolvable:$true] %s95
      %98 = dma.vmem_to_hbm [thread:$0]  %s96, 256, %s3, [#allocation5]
    $region37: #{tpu_custom_call.1} parent=1 // pred_fallthru
      _
    // Predicated region
    $region38: #{tpu_custom_call.1} parent=1 // pred_check
      _
    $region39: #{tpu_custom_call.1} parent=1 // pred_check_branch
      %100 = sbr.rel (0) target = $region41
    $region40: #{tpu_custom_call.1} parent=1 // pred_region
      %101 = dma.done [#allocation5], 256
    $region41: #{tpu_custom_call.1} parent=1 // pred_fallthru
      _
    %102 = vsyncpa [#allocation4], 1
    %103 = vsyncpa [#allocation7], 1
    %104 = vsyncpa [#allocation5], 1

</llo_original>
